<compile_context>
chip_gen: v5e
topology: v5e:2x2
jax: 0.10.0
libtpu: 0.0.40
codegen_flags: <defaults>
</compile_context>

<pallas_src>
import jax
import jax.numpy as jnp
from jax import lax
from jax.experimental import pallas as pl
from jax.experimental.pallas import tpu as pltpu


def _round_up(a, b):
    return -(-a // b) * b


def _cdiv(a, b):
    return -(-a // b)


def _make_gated_conv_kernel(k_size: int, c_out: int, c_pad: int):
    """Kernel body.  k_size/c_out/c_pad are static Python ints."""
    has_halo = k_size > 1

    def kernel(*refs):
        if has_halo:
            x_ref, h_ref, w_ref, b_ref, out_ref = refs
        else:
            x_ref, w_ref, b_ref, out_ref = refs

        x = x_ref[0]                               # (C_in, TL), L lane-dense
        tl = x.shape[-1]                           # static, multiple of 128

        # Tap 0: fused f|g matmul, f32 accumulation on the MXU.
        z = jnp.dot(w_ref[0], x, preferred_element_type=jnp.float32)

        if has_halo:
            h = h_ref[0, 0]                        # (C_in, K-1) right-halo columns
            lane = lax.broadcasted_iota(jnp.int32, x.shape, 1)
            for k in range(1, k_size):             # static, tiny (K=2 by default)
                # xs[:, t] = x[:, t+k]  (roll by tl-k == -k); the last k lanes wrap, so
                # replace them with the halo columns: one VPU select per column.
                xs = pltpu.roll(x, tl - k, 1)
                for j in range(k):
                    xs = jnp.where(lane == tl - k + j, h[:, j:j + 1], xs)
                z = z + jnp.dot(w_ref[k], xs, preferred_element_type=jnp.float32)

        z = z + b_ref[...]                         # (2*Cp, 1) f32 bias, lane-broadcast
        f = jnp.tanh(z[:c_pad])                    # EUP, f32
        g = 1.0 / (1.0 + jnp.exp(-z[c_pad:]))      # sigmoid via exp (EUP), f32
        y = f * g                                  # (Cp, TL) f32
        out_ref[0] = y[:c_out].astype(out_ref.dtype)

    return kernel


def gated_conv(x, w_f, b_f, w_g, b_g, *, tile_l=2048, vmem_limit_bytes=None):
    """GatedConv forward.

    x      : (B, C_in, L)       PyTorch NCL layout (kept throughout)
    w_f/w_g: (C_out, C_in, K)   PyTorch Conv1d weight layout
    b_f/b_g: (C_out,)
    returns  (B, C_out, L_out), L_out = L - K + 1
    """
    B, c_in, L = x.shape
    c_out, c_in_w, ksz = w_f.shape
    if c_in_w != c_in:
        raise ValueError("weight / input channel mismatch")
    l_out = L - ksz + 1
    if l_out < 1:
        raise ValueError("sequence shorter than kernel_size")

    c_pad = _round_up(c_out, 8)          # sublane-aligned branch height
    dt = x.dtype
    itemsize = jnp.dtype(dt).itemsize

    # ---- fused per-tap weights: rows [0:c_out]=f branch, [c_pad:c_pad+c_out]=g branch ----
    wt = jnp.zeros((ksz, 2 * c_pad, c_in), dt)
    wt = wt.at[:, :c_out, :].set(jnp.transpose(w_f, (2, 0, 1)).astype(dt))
    wt = wt.at[:, c_pad:c_pad + c_out, :].set(jnp.transpose(w_g, (2, 0, 1)).astype(dt))
    bt = jnp.zeros((2 * c_pad, 1), jnp.float32)
    bt = bt.at[:c_out, 0].set(b_f.astype(jnp.float32))
    bt = bt.at[c_pad:c_pad + c_out, 0].set(b_g.astype(jnp.float32))

    # ---- L tiling: round tile_l down to a lane multiple; never exceed round_up(L_out,128);
    #      when B == 1 keep >= 2 L tiles so both v7x TensorCores get work. ----
    tl = max(128, (int(tile_l) // 128) * 128)
    cap = _round_up(l_out, 128)
    if B == 1 and l_out >= 256:
        cap = max(128, _round_up(_cdiv(l_out, 2), 128))
    tl = min(tl, cap)
    n_l = _cdiv(l_out, tl)

    inputs = [x]
    in_specs = [pl.BlockSpec((1, c_in, tl), lambda b, l: (b, 0, l))]

    if ksz > 1:
        # Right-halo columns of every tile (global cols (l+1)*tl + j, clamped to L-1).
        # Clamped entries only ever feed output columns >= L_out, which are masked on store.
        idx = jnp.minimum(
            (jnp.arange(1, n_l + 1) * tl)[:, None] + jnp.arange(ksz - 1)[None, :],
            L - 1)                                           # (n_l, K-1)
        halo = jnp.transpose(x[:, :, idx], (0, 2, 1, 3))     # (B, n_l, C_in, K-1)
        inputs.append(halo)
        in_specs.append(pl.BlockSpec((1, 1, c_in, ksz - 1), lambda b, l: (b, l, 0, 0)))

    inputs += [wt, bt]
    in_specs += [
        # Constant index maps -> fetched once, resident across the L loop.
        pl.BlockSpec((ksz, 2 * c_pad, c_in), lambda b, l: (0, 0, 0)),
        pl.BlockSpec((2 * c_pad, 1), lambda b, l: (0, 0)),
    ]
    out_specs = pl.BlockSpec((1, c_out, tl), lambda b, l: (b, 0, l))

    # ---- advisory cost estimate for the XLA scheduler ----
    flops = 2 * B * l_out * ksz * c_in * (2 * c_out) + 8 * B * c_out * l_out
    transcendentals = 3 * B * c_out * l_out
    bytes_accessed = (B * c_in * L + wt.size + B * c_out * l_out) * itemsize + bt.size * 4
    cost = pl.CostEstimate(flops=int(flops), transcendentals=int(transcendentals),
                           bytes_accessed=int(bytes_accessed))

    # ---- raise scoped VMEM only when needed (v5e default 16 MiB); clamp to v7x's 64 MiB ----
    if vmem_limit_bytes is None:
        x_t = _round_up(c_in, 8) * tl * itemsize
        o_t = _round_up(c_out, 8) * tl * itemsize
        h_t = _round_up(c_in, 8) * 128 * itemsize if ksz > 1 else 0
        w_t = ksz * 2 * c_pad * _round_up(c_in, 128) * itemsize
        b_t = 2 * c_pad * 128 * 4
        interm = (2 + 2 * ksz) * c_pad * tl * 4 + 2 * ksz * _round_up(c_in, 8) * tl * itemsize
        need = 2 * (x_t + o_t + h_t + w_t + b_t) + interm + (4 << 20)
        if need > (16 << 20):
            vmem_limit_bytes = int(min(max(need, 32 << 20), 64 << 20))

    cp_kwargs = dict(dimension_semantics=("parallel", "parallel"))
    if vmem_limit_bytes is not None:
        cp_kwargs["vmem_limit_bytes"] = int(vmem_limit_bytes)

    return pl.pallas_call(
        _make_gated_conv_kernel(ksz, c_out, c_pad),
        out_shape=jax.ShapeDtypeStruct((B, c_out, l_out), dt),
        grid_spec=pltpu.PrefetchScalarGridSpec(
            num_scalar_prefetch=0,
            grid=(B, n_l),
            in_specs=in_specs,
            out_specs=out_specs,
        ),
        compiler_params=pltpu.CompilerParams(**cp_kwargs),
        cost_estimate=cost,
    )(*inputs)


def _reference(x, w_f, b_f, w_g, b_g):
    """Pure-JAX reference matching nn.Conv1d semantics (NCL / OIH / valid)."""
    dn = ("NCH", "OIH", "NCH")
    f = lax.conv_general_dilated(x, w_f, (1,), "VALID",
                                 dimension_numbers=dn) + b_f[None, :, None]
    g = lax.conv_general_dilated(x, w_g, (1,), "VALID",
                                 dimension_numbers=dn) + b_g[None, :, None]
    return jnp.tanh(f) * jax.nn.sigmoid(g)


if __name__ == "__main__":
    def _bf16_exact(a):
        # Round test data to bf16-representable f32 so the check is insensitive to the
        # MXU's default-precision pass count (kernel and reference then agree to ~1e-5).
        return a.astype(jnp.bfloat16).astype(jnp.float32)

    def _check(B, C_IN, C_OUT, L, K, salt, tile_l=512):
        key = jax.random.fold_in(jax.random.PRNGKey(0), salt)
        kx, kwf, kbf, kwg, kbg = jax.random.split(key, 5)
        bound = 1.0 / (C_IN * K) ** 0.5
        x = _bf16_exact(jax.random.normal(kx, (B, C_IN, L), jnp.float32))
        w_f = _bf16_exact(jax.random.uniform(kwf, (C_OUT, C_IN, K), jnp.float32, -bound, bound))
        b_f = _bf16_exact(jax.random.uniform(kbf, (C_OUT,), jnp.float32, -bound, bound))
        w_g = _bf16_exact(jax.random.uniform(kwg, (C_OUT, C_IN, K), jnp.float32, -bound, bound))
        b_g = _bf16_exact(jax.random.uniform(kbg, (C_OUT,), jnp.float32, -bound, bound))

        out = jax.block_until_ready(gated_conv(x, w_f, b_f, w_g, b_g, tile_l=tile_l))
        ref = jax.block_until_ready(_reference(x, w_f, b_f, w_g, b_g))
        assert out.shape == (B, C_OUT, L - K + 1), out.shape
        err = float(jnp.max(jnp.abs(out - ref)))
        assert err < 1e-3, f"max abs err {err} (B={B},C_IN={C_IN},C_OUT={C_OUT},L={L},K={K})"

    # Small config consistent with the module defaults (kernel_size=2): single L tile.
    _check(B=2, C_IN=4, C_OUT=8, L=16, K=2, salt=0)
    # Multi-tile path, L_out an exact multiple of the tile (halo column is the last x col),
    # c_out not a multiple of 8 (exercises the sublane padding of the fused weights).
    _check(B=2, C_IN=8, C_OUT=12, L=1025, K=2, salt=1, tile_l=512)
    # B=1 (forces >= 2 L tiles for v7x), partial last tile, clamped halo index.
    _check(B=1, C_IN=8, C_OUT=16, L=1280, K=2, salt=2, tile_l=512)
    # kernel_size=3: multiple rolled taps + 2-column halo splice, partial last tile.
    _check(B=2, C_IN=6, C_OUT=8, L=700, K=3, salt=3, tile_l=256)

    print("KERNEL_OK")
</pallas_src>

<mosaic_0001>
module attributes {stable_mosaic.version = 11 : i64} {
  func.func @kernel(%arg0: i32, %arg1: i32, %arg2: memref<1x4x128xf32, #tpu.memory_space<vmem>>, %arg3: memref<1x1x4x1xf32, #tpu.memory_space<vmem>>, %arg4: memref<2x16x4xf32, #tpu.memory_space<vmem>>, %arg5: memref<16x1xf32, #tpu.memory_space<vmem>>, %arg6: memref<1x8x128xf32, #tpu.memory_space<vmem>>) attributes {dimension_semantics = [#tpu.dimension_semantics<parallel>, #tpu.dimension_semantics<parallel>], iteration_bounds = array<i64: 2, 1>, scalar_prefetch = 0 : i64, scratch_operands = 0 : i64, tpu.core_type = #tpu.core_type<tc>, window_params = [{transform_indices = @transform_0, window_bounds = array<i64: 1, 4, 128>}, {transform_indices = @transform_1, window_bounds = array<i64: 1, 1, 4, 1>}, {pipeline_mode = #tpu.pipeline_mode<synchronous>, transform_indices = @transform_2, window_bounds = array<i64: 2, 16, 4>}, {pipeline_mode = #tpu.pipeline_mode<synchronous>, transform_indices = @transform_3, window_bounds = array<i64: 16, 1>}, {transform_indices = @transform_4, window_bounds = array<i64: 1, 8, 128>}]} {
    %c0 = arith.constant 0 : index
    %c0_0 = arith.constant 0 : index
    %c0_1 = arith.constant 0 : index
    %0 = vector.load %arg2[%c0, %c0_0, %c0_1] : memref<1x4x128xf32, #tpu.memory_space<vmem>>, vector<1x4x128xf32>
    %1 = vector.shape_cast %0 : vector<1x4x128xf32> to vector<4x128xf32>
    %c0_2 = arith.constant 0 : index
    %c0_3 = arith.constant 0 : index
    %c0_4 = arith.constant 0 : index
    %2 = vector.load %arg4[%c0_2, %c0_3, %c0_4] : memref<2x16x4xf32, #tpu.memory_space<vmem>>, vector<1x16x4xf32>
    %3 = vector.shape_cast %2 : vector<1x16x4xf32> to vector<16x4xf32>
    %cst = arith.constant dense<0.000000e+00> : vector<16x128xf32>
    %4 = tpu.matmul %3, %1, %cst {dimension_numbers = #tpu.dot_dimension_numbers<[1], [0], [0], [1], [0, 0, 1, 1], [], []>} : vector<16x4xf32>, vector<4x128xf32>, vector<16x128xf32> -> vector<16x128xf32>
    %c0_5 = arith.constant 0 : index
    %c0_6 = arith.constant 0 : index
    %c0_7 = arith.constant 0 : index
    %c0_8 = arith.constant 0 : index
    %5 = vector.load %arg3[%c0_5, %c0_6, %c0_7, %c0_8] : memref<1x1x4x1xf32, #tpu.memory_space<vmem>>, vector<1x1x4x1xf32>
    %6 = vector.shape_cast %5 : vector<1x1x4x1xf32> to vector<4x1xf32>
    %7 = tpu.iota {dimensions = array<i32: 1>} : vector<4x128xi32>
    %c127_i32 = arith.constant 127 : i32
    %8 = tpu.dynamic_rotate %1 by %c127_i32 dim 1 : vector<4x128xf32>, i32 -> vector<4x128xf32>
    %c127_i32_9 = arith.constant 127 : i32
    %9 = vector.broadcast %c127_i32_9 : i32 to vector<4x128xi32>
    %10 = arith.cmpi eq, %7, %9 : vector<4x128xi32>
    %11 = vector.shape_cast %6 : vector<4x1xf32> to vector<4x1xf32>
    %12 = vector.broadcast %11 : vector<4x1xf32> to vector<4x128xf32>
    %13 = arith.select %10, %12, %8 : vector<4x128xi1>, vector<4x128xf32>
    %c1 = arith.constant 1 : index
    %c0_10 = arith.constant 0 : index
    %c0_11 = arith.constant 0 : index
    %14 = vector.load %arg4[%c1, %c0_10, %c0_11] : memref<2x16x4xf32, #tpu.memory_space<vmem>>, vector<1x16x4xf32>
    %15 = vector.shape_cast %14 : vector<1x16x4xf32> to vector<16x4xf32>
    %cst_12 = arith.constant dense<0.000000e+00> : vector<16x128xf32>
    %16 = tpu.matmul %15, %13, %cst_12 {dimension_numbers = #tpu.dot_dimension_numbers<[1], [0], [0], [1], [0, 0, 1, 1], [], []>} : vector<16x4xf32>, vector<4x128xf32>, vector<16x128xf32> -> vector<16x128xf32>
    %17 = arith.addf %4, %16 : vector<16x128xf32>
    %c0_13 = arith.constant 0 : index
    %c0_14 = arith.constant 0 : index
    %18 = vector.load %arg5[%c0_13, %c0_14] : memref<16x1xf32, #tpu.memory_space<vmem>>, vector<16x1xf32>
    %19 = vector.broadcast %18 : vector<16x1xf32> to vector<16x128xf32>
    %20 = arith.addf %17, %19 : vector<16x128xf32>
    %21 = vector.extract_strided_slice %20 {offsets = [0, 0], sizes = [8, 128], strides = [1, 1]} : vector<16x128xf32> to vector<8x128xf32>
    %22 = math.tanh %21 : vector<8x128xf32>
    %23 = vector.extract_strided_slice %20 {offsets = [8, 0], sizes = [8, 128], strides = [1, 1]} : vector<16x128xf32> to vector<8x128xf32>
    %cst_15 = arith.constant 0.000000e+00 : f32
    %24 = vector.broadcast %cst_15 : f32 to vector<8x128xf32>
    %25 = arith.subf %24, %23 : vector<8x128xf32>
    %26 = math.exp %25 : vector<8x128xf32>
    %cst_16 = arith.constant 1.000000e+00 : f32
    %27 = vector.broadcast %cst_16 : f32 to vector<8x128xf32>
    %28 = arith.addf %27, %26 : vector<8x128xf32>
    %cst_17 = arith.constant 1.000000e+00 : f32
    %29 = vector.broadcast %cst_17 : f32 to vector<8x128xf32>
    %30 = arith.divf %29, %28 : vector<8x128xf32>
    %31 = arith.mulf %22, %30 : vector<8x128xf32>
    %c0_18 = arith.constant 0 : index
    %c0_19 = arith.constant 0 : index
    %c0_20 = arith.constant 0 : index
    %32 = vector.load %arg6[%c0_18, %c0_19, %c0_20] : memref<1x8x128xf32, #tpu.memory_space<vmem>>, vector<1x8x128xf32>
    %33 = vector.shape_cast %32 : vector<1x8x128xf32> to vector<8x128xf32>
    %34 = vector.shape_cast %31 : vector<8x128xf32> to vector<1x8x128xf32>
    tpu.vector_store %arg6[%c0_18, %c0_19, %c0_20], %34 {strides = array<i32>} : memref<1x8x128xf32, #tpu.memory_space<vmem>>, vector<1x8x128xf32>,
    return
  }
  func.func @transform_0(%arg0: i32, %arg1: i32) -> (i32, i32, i32) {
    %c0_i32 = arith.constant 0 : i32
    %c0_i32_0 = arith.constant 0 : i32
    return %arg0, %c0_i32, %arg1 : i32, i32, i32
  }
  func.func @transform_1(%arg0: i32, %arg1: i32) -> (i32, i32, i32, i32) {
    %c0_i32 = arith.constant 0 : i32
    %c0_i32_0 = arith.constant 0 : i32
    %c0_i32_1 = arith.constant 0 : i32
    return %arg0, %arg1, %c0_i32, %c0_i32_0 : i32, i32, i32, i32
  }
  func.func @transform_2(%arg0: i32, %arg1: i32) -> (i32, i32, i32) {
    %c0_i32 = arith.constant 0 : i32
    %c0_i32_0 = arith.constant 0 : i32
    %c0_i32_1 = arith.constant 0 : i32
    %c0_i32_2 = arith.constant 0 : i32
    return %c0_i32, %c0_i32_0, %c0_i32_1 : i32, i32, i32
  }
  func.func @transform_3(%arg0: i32, %arg1: i32) -> (i32, i32) {
    %c0_i32 = arith.constant 0 : i32
    %c0_i32_0 = arith.constant 0 : i32
    %c0_i32_1 = arith.constant 0 : i32
    return %c0_i32, %c0_i32_0 : i32, i32
  }
  func.func @transform_4(%arg0: i32, %arg1: i32) -> (i32, i32, i32) {
    %c0_i32 = arith.constant 0 : i32
    %c0_i32_0 = arith.constant 0 : i32
    return %arg0, %c0_i32, %arg1 : i32, i32, i32
  }
}

</mosaic_0001>

<llo_original>
// kernel: tpu_custom_call.1
$region0: #{tpu_custom_call.1}
  #allocation0 [shape = 'u32[]', space=smem, size = 0x4, offset = 0x4, fixed_abs, tag = 'smem constant byte address 0x4 - core index']
  #allocation1 [shape = 'u32[72,128]{1,0:T(1,128)}', space=vmem, size = 0x9000, scoped, tag = 'internal scratch']
  %s0 = inlined_call_operand.vmem [shape: f32[2,4,16], index: 0, kind: input, shape index: {}]
  %s1 = inlined_call_operand.vmem [shape: f32[2,1,4,1], index: 1, kind: input, shape index: {}]
  %s2 = inlined_call_operand.vmem [shape: f32[2,16,4], index: 2, kind: input, shape index: {}]
  %s3 = inlined_call_operand.vmem [shape: f32[16,1], index: 3, kind: input, shape index: {}]
  %s4 = inlined_call_operand.hbm [shape: f32[2,8,15], index: 4, kind: output, shape index: {}]
  %s5 = sld [smem:[#allocation0]]
  $region49: #{tpu_custom_call.1} parent=0
    _
  %s7 = ssub.s32 1, %s5
  %s8 = scalar_select 0, %s7, %s5
  $region1: #{tpu_custom_call.1} parent=0
    #allocation2 [shape = 'u8[8192]{0}', space=vmem, size = 0x2000, scoped, tag = 'output window, operand 0']
    #allocation3 [shape = 's32[2]{0}', space=sflag, size = 0x8, scoped, tag = 'scoped memory for tpu_custom_call.1']
    %9 = vsyncpa [#allocation3], 0
    %s10 = scalar_lea.sflag [#allocation3], 1
    %11 = vsyncpa %s10, 0
    loop: start=0, step=1, limit=4
    $region2: #{tpu_custom_call.1} parent=1 // loop_pre_header
      _
    $region3: #{tpu_custom_call.1} parent=1 // loop_header
      %s13 = sphi 0, %s17
      %p14 = scmp.ge.s32.totalorder %s13, 4
      %s20 = sphi 0, %s32
      %s21 = sphi 0, %s28
      %s22 = sphi 0, %s20
      %s23 = sphi 0, %s21
      %s24 = sphi 0, %s22
      %s25 = sphi 0, %s23
      %s37 = sphi 0, %s39
      %s40 = sphi 0, %s37
      %s41 = sphi 0, %s40
      %s57 = sphi 0, %s41
      %s65 = sphi 0, %s67
      %s68 = sphi 0, %s65
      %s69 = sphi 0, %s68
      %s85 = sphi 0, %s69
      %s89 = sphi 0, %s89
      %s91 = sphi 0, %s89
      %s92 = sphi 0, %s91
      %s106 = sphi 0, %s92
      %s110 = sphi 0, %s110
      %s112 = sphi 0, %s110
      %s113 = sphi 0, %s112
      %s127 = sphi 0, %s113
      %s135 = sphi 0, %s137
      %s138 = sphi 0, %s135
      %s139 = sphi 0, %s138
      %s155 = sphi 0, %s139
    $region4: #{tpu_custom_call.1} parent=1 // loop_header_branch
      %16 = sbr.rel (%p14) target = $region8
    $region5: #{tpu_custom_call.1} parent=1 // loop_body
      %s18 = ssub.s32 %s13, 1
      %s19 = ssub.s32 %s13, 2
      %s26 = sadd.s32 1, %s21
      %p27 = scmp.ge.s32.totalorder %s26, 1
      %s28 = scalar_select %p27, 0, %s26
      %s29 = sadd.s32 1, %s20
      %s30 = scalar_select %p27, %s29, %s20
      %p31 = scmp.ge.s32.totalorder %s30, 2
      %s32 = scalar_select %p31, 0, %s30
      %s33 = ssub.s32 %s20, %s32
      %s34 = ssub.s32 %s21, %s28
      %s35 = sor.u32 %s33, %s34
      %p36 = scmp.eq.s32.totalorder %s35, 0
      %s38 = sadd.s32 %s37, 1
      %s39 = scalar_select %p36, %s37, %s38
      %p42 = pneg %p36
      %p43 = scmp.eq.s32.totalorder %s13, 1
      %p44 = por %p42, %p43
      %p45 = scmp.ne.s32.totalorder %s37, %s40
      %p46 = scmp.eq.s32.totalorder %s13, 0
      %p47 = por %p45, %p46
      %p48 = scmp.ne.s32.totalorder %s37, %s40
      %p49 = scmp.eq.s32.totalorder %s18, 1
      %p50 = por %p48, %p49
      %p51 = scmp.ne.s32.totalorder %s40, %s41
      %p52 = scmp.eq.s32.totalorder %s18, 0
      %p53 = por %p51, %p52
      %p54 = scmp.ne.s32.totalorder %s40, %s41
      %p55 = scmp.eq.s32.totalorder %s19, 1
      %p56 = por %p54, %p55
      %p58 = scmp.ne.s32.totalorder %s41, %s57
      %p59 = scmp.eq.s32.totalorder %s19, 0
      %p60 = por %p58, %p59
      %s61 = ssub.s32 %s20, %s32
      %s62 = ssub.s32 %s21, %s28
      %s63 = sor.u32 %s61, %s62
      %p64 = scmp.eq.s32.totalorder %s63, 0
      %s66 = sadd.s32 %s65, 1
      %s67 = scalar_select %p64, %s65, %s66
      %p70 = pneg %p64
      %p71 = scmp.eq.s32.totalorder %s13, 1
      %p72 = por %p70, %p71
      %p73 = scmp.ne.s32.totalorder %s65, %s68
      %p74 = scmp.eq.s32.totalorder %s13, 0
      %p75 = por %p73, %p74
      %p76 = scmp.ne.s32.totalorder %s65, %s68
      %p77 = scmp.eq.s32.totalorder %s18, 1
      %p78 = por %p76, %p77
      %p79 = scmp.ne.s32.totalorder %s68, %s69
      %p80 = scmp.eq.s32.totalorder %s18, 0
      %p81 = por %p79, %p80
      %p82 = scmp.ne.s32.totalorder %s68, %s69
      %p83 = scmp.eq.s32.totalorder %s19, 1
      %p84 = por %p82, %p83
      %p86 = scmp.ne.s32.totalorder %s69, %s85
      %p87 = scmp.eq.s32.totalorder %s19, 0
      %p88 = por %p86, %p87
      %s90 = sadd.s32 %s89, 1
      %p93 = scmp.eq.s32.totalorder %s13, 1
      %p94 = scmp.ne.s32.totalorder %s89, %s91
      %p95 = scmp.eq.s32.totalorder %s13, 0
      %p96 = por %p94, %p95
      %p97 = scmp.ne.s32.totalorder %s89, %s91
      %p98 = scmp.eq.s32.totalorder %s18, 1
      %p99 = por %p97, %p98
      %p100 = scmp.ne.s32.totalorder %s91, %s92
      %p101 = scmp.eq.s32.totalorder %s18, 0
      %p102 = por %p100, %p101
      %p103 = scmp.ne.s32.totalorder %s91, %s92
      %p104 = scmp.eq.s32.totalorder %s19, 1
      %p105 = por %p103, %p104
      %p107 = scmp.ne.s32.totalorder %s92, %s106
      %p108 = scmp.eq.s32.totalorder %s19, 0
      %p109 = por %p107, %p108
      %s111 = sadd.s32 %s110, 1
      %p114 = scmp.eq.s32.totalorder %s13, 1
      %p115 = scmp.ne.s32.totalorder %s110, %s112
      %p116 = scmp.eq.s32.totalorder %s13, 0
      %p117 = por %p115, %p116
      %p118 = scmp.ne.s32.totalorder %s110, %s112
      %p119 = scmp.eq.s32.totalorder %s18, 1
      %p120 = por %p118, %p119
      %p121 = scmp.ne.s32.totalorder %s112, %s113
      %p122 = scmp.eq.s32.totalorder %s18, 0
      %p123 = por %p121, %p122
      %p124 = scmp.ne.s32.totalorder %s112, %s113
      %p125 = scmp.eq.s32.totalorder %s19, 1
      %p126 = por %p124, %p125
      %p128 = scmp.ne.s32.totalorder %s113, %s127
      %p129 = scmp.eq.s32.totalorder %s19, 0
      %p130 = por %p128, %p129
      %s131 = ssub.s32 %s20, %s32
      %s132 = ssub.s32 %s21, %s28
      %s133 = sor.u32 %s131, %s132
      %p134 = scmp.eq.s32.totalorder %s133, 0
      %s136 = sadd.s32 %s135, 1
      %s137 = scalar_select %p134, %s135, %s136
      %p140 = pneg %p134
      %p141 = scmp.eq.s32.totalorder %s13, 1
      %p142 = por %p140, %p141
      %p143 = scmp.ne.s32.totalorder %s135, %s138
      %p144 = scmp.eq.s32.totalorder %s13, 0
      %p145 = por %p143, %p144
      %p146 = scmp.ne.s32.totalorder %s135, %s138
      %p147 = scmp.eq.s32.totalorder %s18, 1
      %p148 = por %p146, %p147
      %p149 = scmp.ne.s32.totalorder %s138, %s139
      %p150 = scmp.eq.s32.totalorder %s18, 0
      %p151 = por %p149, %p150
      %p152 = scmp.ne.s32.totalorder %s138, %s139
      %p153 = scmp.eq.s32.totalorder %s19, 1
      %p154 = por %p152, %p153
      %p156 = scmp.ne.s32.totalorder %s139, %s155
      %p157 = scmp.eq.s32.totalorder %s19, 0
      %p158 = por %p156, %p157
      %p159 = scmp.le.s32.totalorder 1, %s13
      %p160 = scmp.lt.s32.totalorder %s13, 3
      %p161 = pnand %p159, %p160
      %p162 = pneg %p161
      // Predicated region
      $region9: #{tpu_custom_call.1} parent=5 // pred_check
        _
      $region10: #{tpu_custom_call.1} parent=5 // pred_check_branch
        %164 = sbr.rel (%p161) target = $region12
      $region11: #{tpu_custom_call.1} parent=5 // pred_region
        %s165 = ssub.s32 %s13, 1
        // Predicated region
        $region13: #{tpu_custom_call.1} parent=11 // pred_check
          %p166 = pneg %p102
        $region14: #{tpu_custom_call.1} parent=11 // pred_check_branch
          %168 = sbr.rel (%p166) target = $region16
        $region15: #{tpu_custom_call.1} parent=11 // pred_region
          _
        $region16: #{tpu_custom_call.1} parent=11 // pred_fallthru
          _
        // Predicated region
        $region17: #{tpu_custom_call.1} parent=11 // pred_check
          %p169 = pneg %p123
        $region18: #{tpu_custom_call.1} parent=11 // pred_check_branch
          %171 = sbr.rel (%p169) target = $region20
        $region19: #{tpu_custom_call.1} parent=11 // pred_region
          _
        $region20: #{tpu_custom_call.1} parent=11 // pred_fallthru
          _
      $region12: #{tpu_custom_call.1} parent=5 // pred_fallthru
        _
      %p172 = scmp.lt.s32.totalorder %s13, 2
      // Predicated region
      $region21: #{tpu_custom_call.1} parent=5 // pred_check
        %p173 = pneg %p172
      $region22: #{tpu_custom_call.1} parent=5 // pred_check_branch
        %175 = sbr.rel (%p173) target = $region24
      $region23: #{tpu_custom_call.1} parent=5 // pred_region
        // Predicated region
        $region25: #{tpu_custom_call.1} parent=23 // pred_check
          %p176 = pneg %p47
        $region26: #{tpu_custom_call.1} parent=23 // pred_check_branch
          %178 = sbr.rel (%p176) target = $region28
        $region27: #{tpu_custom_call.1} parent=23 // pred_region
          %p179 = scmp.lt.s32.totalorder %s20, 1
          %s180 = scalar_select %p179, %s20, 1
          %p181 = scmp.lt.s32.totalorder %s21, 0
          %s182 = scalar_select %p181, %s21, 0
          %s183 = sadd.s32 %s182, %s180
          %s184 = smul.addr %s183, 4
          %s185 = scalar_lea.vmem %s0, %s184
        $region28: #{tpu_custom_call.1} parent=23 // pred_fallthru
          _
        // Predicated region
        $region29: #{tpu_custom_call.1} parent=23 // pred_check
          %p186 = pneg %p75
        $region30: #{tpu_custom_call.1} parent=23 // pred_check_branch
          %188 = sbr.rel (%p186) target = $region32
        $region31: #{tpu_custom_call.1} parent=23 // pred_region
          %p189 = scmp.lt.s32.totalorder %s20, 1
          %s190 = scalar_select %p189, %s20, 1
          %p191 = scmp.lt.s32.totalorder %s21, 0
          %s192 = scalar_select %p191, %s21, 0
          %s193 = sadd.s32 %s192, %s190
          %s194 = smul.addr %s193, 4
          %s195 = scalar_lea.vmem %s1, %s194
        $region32: #{tpu_custom_call.1} parent=23 // pred_fallthru
          _
      $region24: #{tpu_custom_call.1} parent=5 // pred_fallthru
        _
      %p196 = scmp.le.s32.totalorder 1, %s13
      %p197 = scmp.lt.s32.totalorder %s13, 3
      %p198 = pnand %p196, %p197
      %p199 = pneg %p198
      // Predicated region
      $region33: #{tpu_custom_call.1} parent=5 // pred_check
        _
      $region34: #{tpu_custom_call.1} parent=5 // pred_check_branch
        %201 = sbr.rel (%p198) target = $region36
      $region35: #{tpu_custom_call.1} parent=5 // pred_region
        %s202 = ssub.s32 %s13, 1
        %p203 = scmp.lt.s32.totalorder %s22, 1
        %s204 = scalar_select %p203, %s22, 1
        %p205 = scmp.lt.s32.totalorder %s23, 0
        %s206 = scalar_select %p205, %s23, 0
        %s207 = sadd.s32 %s206, %s204
        %s208 = smul.addr %s207, 4
        %s209 = scalar_lea.vmem %s0, %s208
        %p210 = pneg %p53
        %p211 = pneg %p50
        %p212 = scmp.lt.s32.totalorder %s22, 1
        %s213 = scalar_select %p212, %s22, 1
        %p214 = scmp.lt.s32.totalorder %s23, 0
        %s215 = scalar_select %p214, %s23, 0
        %s216 = sadd.s32 %s215, %s213
        %s217 = smul.addr %s216, 4
        %s218 = scalar_lea.vmem %s1, %s217
        %p219 = pneg %p81
        %p220 = pneg %p78
        %p221 = pneg %p102
        %p222 = pneg %p99
        %p223 = pneg %p123
        %p224 = pneg %p120
        %p225 = pneg %p151
        %p226 = pneg %p148
        %s227 = sand.u32 %s138, 1
        %s228 = scalar_lea.sflag [#allocation3], %s227
        %s229 = sand.u32 %s138, 1
        %s230 = smul.addr %s229, 8
        %s231 = scalar_lea.vmem [#allocation2], %s230
        %p232 = scmp.lt.s32.totalorder %s22, 1
        %s233 = scalar_select %p232, %s22, 1
        %p234 = scmp.lt.s32.totalorder %s23, 0
        %s235 = scalar_select %p234, %s23, 0
        %s236 = sadd.s32 %s235, %s233
        %s237 = smul.addr %s236, 4
        %s238 = scalar_lea.vmem %s0, %s237
        %p239 = scmp.lt.s32.totalorder %s22, 1
        %s240 = scalar_select %p239, %s22, 1
        %p241 = scmp.lt.s32.totalorder %s23, 0
        %s242 = scalar_select %p241, %s23, 0
        %s243 = sadd.s32 %s242, %s240
        %s244 = smul.addr %s243, 4
        %s245 = scalar_lea.vmem %s1, %s244
        %v246 = vld [vmem:[%s238] sm:$0xf]
        %v247 = vld [vmem:[%s2] sm:$0xff]
        %v248 = vld [vmem:[%s2 + $0x8] sm:$0xff]
        %v249 = vld [vmem:[%s245] sm:$0xf]
        %v250 = vlaneseq
        %v251 = vand.u32 %v250, 127
        %252 = vrot.lane.b32.xlu0 %v246, 127
        %v253 = vpop.permute.xlu0 %252
        %vm254 = vcmp.eq.s32.totalorder %v251, 127
        %256 = vset.pattern.permute.xlu0 0
        %257 = vperm.xlu0 %256, %v249
        %v258 = vpop.permute.xlu0 %257
        %v260 = vsel %vm254, %v258, %v253
        %s261 = scalar_lea.vmem %s2, 16
        %v262 = vld [vmem:[%s261] sm:$0xff]
        %v263 = vld [vmem:[%s261 + $0x8] sm:$0xff]
        %vm264 = vcmask 31744
        %v266 = vsel %vm264, %v262, 0
        %v269 = vsel %vm264, %v263, 0
        %vm271 = vcmask 1043456
        %v273 = vsel %vm271, %v260, 0
        %275 = vmatpush.msra.mxu0 0.0
        %276 = vmatpush.msra.mxu0 0.0
        %277 = vmatpush.msra.mxu0 0.0
        %278 = vmatpush.msra.mxu0 0.0
        %279 = vmatpush.msra.mxu0 0.0
        %280 = vmatpush.msra.mxu0 0.0
        %281 = vmatpush.msra.mxu0 0.0
        %282 = vmatpush.msra.mxu0 0.0
        %283 = vmatpush.msra.mxu0 0.0
        %284 = vmatpush.msra.mxu0 0.0
        %285 = vmatpush.msra.mxu0 0.0
        %286 = vmatpush.msra.mxu0 0.0
        %287 = vmatpush.msra.mxu0 0.0
        %288 = vmatpush.msra.mxu0 0.0
        %289 = vmatpush.msra.mxu0 0.0
        %290 = vmatpush.msra.mxu0 %v273
        %291 = vmatmul.f32.gmra.mxu0 %v266
        %v292 = vpop.f32.mrf.mxu0
        %v293 = vadd.f32 0.0, %v292
        %294 = vmatmul.f32.gmra.mxu0 %v269
        %v295 = vpop.f32.mrf.mxu0
        %v296 = vadd.f32 0.0, %v295
        %297 = vdwg.mxu0
        %v299 = vsel %vm264, %v247, 0
        %v302 = vsel %vm264, %v248, 0
        %v305 = vsel %vm271, %v246, 0
        %307 = vmatpush.msra.mxu0 0.0
        %308 = vmatpush.msra.mxu0 0.0
        %309 = vmatpush.msra.mxu0 0.0
        %310 = vmatpush.msra.mxu0 0.0
        %311 = vmatpush.msra.mxu0 0.0
        %312 = vmatpush.msra.mxu0 0.0
        %313 = vmatpush.msra.mxu0 0.0
        %314 = vmatpush.msra.mxu0 0.0
        %315 = vmatpush.msra.mxu0 0.0
        %316 = vmatpush.msra.mxu0 0.0
        %317 = vmatpush.msra.mxu0 0.0
        %318 = vmatpush.msra.mxu0 0.0
        %319 = vmatpush.msra.mxu0 0.0
        %320 = vmatpush.msra.mxu0 0.0
        %321 = vmatpush.msra.mxu0 0.0
        %322 = vmatpush.msra.mxu0 %v305
        %323 = vmatmul.f32.gmra.mxu0 %v299
        %v324 = vpop.f32.mrf.mxu0
        %v325 = vadd.f32 %v293, %v324
        %326 = vmatmul.f32.gmra.mxu0 %v302
        %v327 = vpop.f32.mrf.mxu0
        %v328 = vadd.f32 %v296, %v327
        %329 = vdwg.mxu0
        %v330 = vld [vmem:[%s3] sm:$0xff]
        %v331 = vld [vmem:[%s3 + $0x8] sm:$0xff]
        %333 = vset.pattern.permute.xlu0 0
        %334 = vperm.xlu0 %333, %v330
        %v335 = vpop.permute.xlu0 %334
        %338 = vset.pattern.permute.xlu0 0
        %339 = vperm.xlu0 %338, %v331
        %v340 = vpop.permute.xlu0 %339
        %v342 = vadd.f32 %v325, %v335
        %v343 = vadd.f32 %v328, %v340
        %v344 = vtanh.pop %v342
        %v345 = vsub.f32 0.0, %v343
        %v346 = vmul.f32 %v345, 1.442695
        %v347 = vpow.pop %v346
        %v348 = vadd.f32 %v347, 1.0
        %v349 = vrcp.pop %v348
        %v350 = vmul.f32 %v348, %v349
        %v351 = vsub.f32 1.0, %v350
        %v352 = vmul.f32 %v349, %v351
        %v353 = vadd.f32 %v349, %v352
        %vm354 = vweird.f32 %v348
        %vm355 = vweird.f32 %v349
        %vm356 = vmor %vm354, %vm355
        %v357 = vsel %vm356, %v349, %v353
        %v358 = vand.u32 2147483647, %v348
        %vm359 = vcmp.eq.f32.partialorder %v358, 8.507059e+37
        %v360 = vand.u32 %v348, 2147483648
        %v361 = vor.u32 1.1754944e-38, %v360
        %v362 = vsel %vm359, %v361, %v357
        %v363 = vmul.f32 1.0, %v362
        %v364 = vmul.f32 %v344, %v363
        %365 = vst [vmem:[%s231] sm:$0xff] %v364
        %s366 = sand.u32 %s138, 1
        %s367 = scalar_lea.sflag [#allocation3], %s366
        %s368 = sand.u32 %s138, 1
        %s369 = smul.addr %s368, 8
        %s370 = scalar_lea.vmem [#allocation2], %s369
        // Predicated region
        $region37: #{tpu_custom_call.1} parent=35 // pred_check
          %p371 = pneg %p148
        $region38: #{tpu_custom_call.1} parent=35 // pred_check_branch
          %373 = sbr.rel (%p371) target = $region40
        $region39: #{tpu_custom_call.1} parent=35 // pred_region
          %375 = vsyncadd %s367, 0
          %s376 = sadd.s32 %s23, %s22
          %s377 = smul.addr %s376, 8
          %s378 = scalar_lea.hbm %s4, %s377
          %s380 = sshll.u32 %s370, 4
          %s381 = int_to_ptr.vmem [resolvable:$true] %s380
          %s382 = sshll.u32 %s378, 4
          %s383 = int_to_ptr.hbm [resolvable:$true] %s382
          %385 = dma.vmem_to_hbm [thread:$0]  %s381, 128, %s383, %s367
        $region40: #{tpu_custom_call.1} parent=35 // pred_fallthru
          _
      $region36: #{tpu_custom_call.1} parent=5 // pred_fallthru
        _
      %p386 = scmp.le.s32.totalorder 2, %s13
      // Predicated region
      $region41: #{tpu_custom_call.1} parent=5 // pred_check
        %p387 = pneg %p386
      $region42: #{tpu_custom_call.1} parent=5 // pred_check_branch
        %389 = sbr.rel (%p387) target = $region44
      $region43: #{tpu_custom_call.1} parent=5 // pred_region
        %s390 = ssub.s32 %s13, 2
        // Predicated region
        $region45: #{tpu_custom_call.1} parent=43 // pred_check
          %p391 = pneg %p154
        $region46: #{tpu_custom_call.1} parent=43 // pred_check_branch
          %393 = sbr.rel (%p391) target = $region48
        $region47: #{tpu_custom_call.1} parent=43 // pred_region
          %s394 = sand.u32 %s139, 1
          %s395 = scalar_lea.sflag [#allocation3], %s394
          %s396 = sand.u32 %s139, 1
          %s397 = smul.addr %s396, 8
          %s398 = scalar_lea.vmem [#allocation2], %s397
          %400 = dma.done %s395, 128
        $region48: #{tpu_custom_call.1} parent=43 // pred_fallthru
          _
      $region44: #{tpu_custom_call.1} parent=5 // pred_fallthru
        _
    $region6: #{tpu_custom_call.1} parent=1 // loop_footer
      %s17 = sadd.s32 1, %s13
    $region7: #{tpu_custom_call.1} parent=1 // loop_footer_branch
      %12 = sbr.rel target = $region3
    $region8: #{tpu_custom_call.1} parent=1 // loop_exit
      _
    %401 = vsyncpa [#allocation3], 1
    %s402 = scalar_lea.sflag [#allocation3], 1
    %403 = vsyncpa %s402, 1

</llo_original>
